<compile_context>
chip_gen: v5e
topology: v5e:2x2
jax: 0.10.0
libtpu: 0.0.40
codegen_flags: <defaults>
</compile_context>

<pallas_src>
import jax
import jax.numpy as jnp
from jax.experimental import pallas as pl
from jax.experimental.pallas import tpu as pltpu


def _rnn_step_kernel(xh_ref, wcat_ref, brnn_ref, wout_ref, bout_ref,
                     y_ref, hout_ref):
    # xh_ref : (B, input+hidden)  -- [x, h] already concatenated (lane-dense slab)
    # wcat   : (input+hidden, hidden)
    # brnn   : (1, hidden)        -- b_ih + b_hh
    # wout   : (hidden, input)    -- W_out^T
    # bout   : (1, input)
    xh = xh_ref[...]
    # One MXU push sequence with K = input+hidden instead of two (K=32 and K=64).
    pre = jnp.dot(xh, wcat_ref[...], preferred_element_type=jnp.float32) + brnn_ref[...]
    h_new = jnp.tanh(pre)                                   # EUP
    hout_ref[...] = h_new.astype(hout_ref.dtype)
    y = jnp.dot(h_new, wout_ref[...], preferred_element_type=jnp.float32) + bout_ref[...]
    y_ref[...] = y.astype(y_ref.dtype)


def prepare_params(torch_layout_params):
    """One-time (outside the hot path) repack of PyTorch-layout weights.

    torch_layout_params:
        W_ih  (hidden, input), W_hh (hidden, hidden), b_ih (hidden,), b_hh (hidden,),
        W_out (input, hidden), b_out (input,)
    """
    p = torch_layout_params
    hidden_size = p["W_ih"].shape[0]
    input_size = p["W_ih"].shape[1]
    w_cat = jnp.concatenate([p["W_ih"].T, p["W_hh"].T], axis=0)    # (in+hid, hid)
    b_rnn = (p["b_ih"] + p["b_hh"]).reshape(1, hidden_size)
    w_out_t = p["W_out"].T                                          # (hid, in)
    b_out = p["b_out"].reshape(1, input_size)
    return {
        "W_cat": jnp.asarray(w_cat, jnp.float32),
        "b_rnn": jnp.asarray(b_rnn, jnp.float32),
        "W_out_T": jnp.asarray(w_out_t, jnp.float32),
        "b_out": jnp.asarray(b_out, jnp.float32),
        "input_size": input_size,
        "hidden_size": hidden_size,
    }


def rnn_model_forward(x, hidden, prepared):
    """Equivalent of Model.forward(input, hidden) for rnn_module='RNN', num_layers=1.

    x       : (B, input_size) float32
    hidden  : (1, B, hidden_size) float32
    prepared: output of prepare_params (weights already fused / transposed)
    """
    B, input_size = x.shape
    hidden_size = prepared["hidden_size"]

    # Single cheap concat per step; lets the kernel do one fused K=(in+hid) matmul.
    xh = jnp.concatenate([x, hidden[0]], axis=-1)          # (B, input+hidden)

    vmem = pl.BlockSpec(memory_space=pltpu.MemorySpace.VMEM)
    y, h_new = pl.pallas_call(
        _rnn_step_kernel,
        out_shape=(
            jax.ShapeDtypeStruct((B, input_size), jnp.float32),
            jax.ShapeDtypeStruct((B, hidden_size), jnp.float32),
        ),
        in_specs=[vmem] * 5,
        out_specs=(vmem, vmem),
    )(xh, prepared["W_cat"], prepared["b_rnn"], prepared["W_out_T"], prepared["b_out"])

    return y, h_new[None, :, :]  # hidden shape (num_layers=1, B, hidden)


def init_torch_layout_params(key, input_size, hidden_size):
    # Deterministic synthetic init matching PyTorch nn.RNN / nn.Linear shapes.
    k = 1.0 / jnp.sqrt(hidden_size)
    keys = jax.random.split(key, 6)
    return {
        "W_ih": jax.random.uniform(keys[0], (hidden_size, input_size), jnp.float32, -k, k),
        "W_hh": jax.random.uniform(keys[1], (hidden_size, hidden_size), jnp.float32, -k, k),
        "b_ih": jax.random.uniform(keys[2], (hidden_size,), jnp.float32, -k, k),
        "b_hh": jax.random.uniform(keys[3], (hidden_size,), jnp.float32, -k, k),
        "W_out": jax.random.uniform(keys[4], (input_size, hidden_size), jnp.float32, -k, k),
        "b_out": jax.random.uniform(keys[5], (input_size,), jnp.float32, -k, k),
    }


if __name__ == "__main__":
    input_size = 32
    hidden_size = 64
    batch_size = 8

    key = jax.random.PRNGKey(0)
    kp, kx = jax.random.split(key, 2)
    torch_params = init_torch_layout_params(kp, input_size, hidden_size)
    prepared = prepare_params(torch_params)            # one-time repack, not per step

    x = jax.random.normal(kx, (batch_size, input_size), jnp.float32)
    hidden = jnp.zeros((1, batch_size, hidden_size), jnp.float32)  # initHidden

    fwd = jax.jit(lambda a, b: rnn_model_forward(a, b, prepared))
    y, h_new = fwd(x, hidden)
    jax.block_until_ready((y, h_new))

    # Pure-JAX reference of the exact PyTorch semantics (unfused layout).
    pre = (x @ torch_params["W_ih"].T + torch_params["b_ih"]
           + hidden[0] @ torch_params["W_hh"].T + torch_params["b_hh"])
    h_ref = jnp.tanh(pre)
    y_ref = h_ref @ torch_params["W_out"].T + torch_params["b_out"]
    assert jnp.allclose(y, y_ref, atol=1e-5), "output mismatch"
    assert jnp.allclose(h_new[0], h_ref, atol=1e-5), "hidden mismatch"
    assert y.shape == (batch_size, input_size)
    assert h_new.shape == (1, batch_size, hidden_size)

    print("KERNEL_OK")
</pallas_src>

<mosaic_0001>
module attributes {stable_mosaic.version = 11 : i64} {
  func.func @_rnn_step_kernel(%arg0: memref<8x96xf32, #tpu.memory_space<vmem>>, %arg1: memref<96x64xf32, #tpu.memory_space<vmem>>, %arg2: memref<1x64xf32, #tpu.memory_space<vmem>>, %arg3: memref<64x32xf32, #tpu.memory_space<vmem>>, %arg4: memref<1x32xf32, #tpu.memory_space<vmem>>, %arg5: memref<8x32xf32, #tpu.memory_space<vmem>>, %arg6: memref<8x64xf32, #tpu.memory_space<vmem>>) attributes {dimension_semantics = [], scalar_prefetch = 0 : i64, scratch_operands = 0 : i64, tpu.core_type = #tpu.core_type<tc>} {
    %c0 = arith.constant 0 : index
    %c0_0 = arith.constant 0 : index
    %0 = vector.load %arg0[%c0, %c0_0] : memref<8x96xf32, #tpu.memory_space<vmem>>, vector<8x96xf32>
    %c0_1 = arith.constant 0 : index
    %c0_2 = arith.constant 0 : index
    %1 = vector.load %arg1[%c0_1, %c0_2] : memref<96x64xf32, #tpu.memory_space<vmem>>, vector<96x64xf32>
    %cst = arith.constant dense<0.000000e+00> : vector<8x64xf32>
    %2 = tpu.matmul %0, %1, %cst {dimension_numbers = #tpu.dot_dimension_numbers<[1], [0], [0], [1], [0, 0, 1, 1], [], []>} : vector<8x96xf32>, vector<96x64xf32>, vector<8x64xf32> -> vector<8x64xf32>
    %c0_3 = arith.constant 0 : index
    %c0_4 = arith.constant 0 : index
    %3 = vector.load %arg2[%c0_3, %c0_4] : memref<1x64xf32, #tpu.memory_space<vmem>>, vector<1x64xf32>
    %4 = vector.broadcast %3 : vector<1x64xf32> to vector<8x64xf32>
    %5 = arith.addf %2, %4 : vector<8x64xf32>
    %6 = math.tanh %5 : vector<8x64xf32>
    %c0_5 = arith.constant 0 : index
    %c0_6 = arith.constant 0 : index
    %7 = vector.load %arg6[%c0_5, %c0_6] : memref<8x64xf32, #tpu.memory_space<vmem>>, vector<8x64xf32>
    tpu.vector_store %arg6[%c0_5, %c0_6], %6 {strides = array<i32>} : memref<8x64xf32, #tpu.memory_space<vmem>>, vector<8x64xf32>,
    %c0_7 = arith.constant 0 : index
    %c0_8 = arith.constant 0 : index
    %8 = vector.load %arg3[%c0_7, %c0_8] : memref<64x32xf32, #tpu.memory_space<vmem>>, vector<64x32xf32>
    %cst_9 = arith.constant dense<0.000000e+00> : vector<8x32xf32>
    %9 = tpu.matmul %6, %8, %cst_9 {dimension_numbers = #tpu.dot_dimension_numbers<[1], [0], [0], [1], [0, 0, 1, 1], [], []>} : vector<8x64xf32>, vector<64x32xf32>, vector<8x32xf32> -> vector<8x32xf32>
    %c0_10 = arith.constant 0 : index
    %c0_11 = arith.constant 0 : index
    %10 = vector.load %arg4[%c0_10, %c0_11] : memref<1x32xf32, #tpu.memory_space<vmem>>, vector<1x32xf32>
    %11 = vector.broadcast %10 : vector<1x32xf32> to vector<8x32xf32>
    %12 = arith.addf %9, %11 : vector<8x32xf32>
    %c0_12 = arith.constant 0 : index
    %c0_13 = arith.constant 0 : index
    %13 = vector.load %arg5[%c0_12, %c0_13] : memref<8x32xf32, #tpu.memory_space<vmem>>, vector<8x32xf32>
    tpu.vector_store %arg5[%c0_12, %c0_13], %12 {strides = array<i32>} : memref<8x32xf32, #tpu.memory_space<vmem>>, vector<8x32xf32>,
    return
  }
}

</mosaic_0001>

<llo_original>
// kernel: _lambda_.1
$region0: #{_lambda_.1}
  #allocation0 [shape = 'u32[]', space=smem, size = 0x4, offset = 0x4, fixed_abs, tag = 'smem constant byte address 0x4 - core index']
  #allocation1 [shape = 'u32[72,128]{1,0:T(1,128)}', space=vmem, size = 0x9000, scoped, tag = 'internal scratch']
  %s0 = inlined_call_operand.vmem [shape: f32[8,96], index: 0, kind: input, shape index: {}]
  %s1 = inlined_call_operand.hbm [shape: f32[96,64], index: 1, kind: input, shape index: {}]
  %s2 = inlined_call_operand.vmem [shape: f32[1,64], index: 2, kind: input, shape index: {}]
  %s3 = inlined_call_operand.hbm [shape: f32[64,32], index: 3, kind: input, shape index: {}]
  %s4 = inlined_call_operand.vmem [shape: f32[1,32], index: 4, kind: input, shape index: {}]
  %s5 = inlined_call_operand.hbm [shape: f32[8,32], index: 5, kind: output, shape index: {0}]
  %s6 = inlined_call_operand.hbm [shape: f32[8,64], index: 6, kind: output, shape index: {1}]
  %7 = xla_tuple %s5, %s6
  %s8 = sld [smem:[#allocation0]]
  $region46: #{_lambda_.1} parent=0
    _
  %s10 = ssub.s32 1, %s8
  %s11 = scalar_select 0, %s10, %s8
  $region1: #{_lambda_.1} parent=0
    #allocation2 [shape = 'u8[49152]{0}', space=vmem, size = 0xc000, scoped, tag = 'input window, operand 1, single buffered']
    #allocation3 [shape = 's32[1]{0}', space=sflag, size = 0x4, scoped, tag = 'scoped memory for _lambda_.1']
    #allocation4 [shape = 's32[1]{0}', space=sflag, size = 0x4, scoped, tag = 'scoped memory for _lambda_.1']
    #allocation5 [shape = 'u8[32768]{0}', space=vmem, size = 0x8000, scoped, tag = 'input window, operand 3, single buffered']
    #allocation6 [shape = 's32[1]{0}', space=sflag, size = 0x4, scoped, tag = 'scoped memory for _lambda_.1']
    #allocation7 [shape = 'u8[4096]{0}', space=vmem, size = 0x1000, scoped, tag = 'output window, operand 0, single buffered']
    #allocation8 [shape = 'u8[4096]{0}', space=vmem, size = 0x1000, scoped, tag = 'output window, operand 1, single buffered']
    #allocation9 [shape = 's32[1]{0}', space=sflag, size = 0x4, scoped, tag = 'scoped memory for _lambda_.1']
    %12 = vsyncpa [#allocation3], 0
    %13 = vsyncpa [#allocation6], 0
    %14 = vsyncpa [#allocation4], 0
    %15 = vsyncpa [#allocation9], 0
    // Predicated region
    $region2: #{_lambda_.1} parent=1 // pred_check
      _
    $region3: #{_lambda_.1} parent=1 // pred_check_branch
      %17 = sbr.rel (0) target = $region5
    $region4: #{_lambda_.1} parent=1 // pred_region
      _
    $region5: #{_lambda_.1} parent=1 // pred_fallthru
      _
    // Predicated region
    $region6: #{_lambda_.1} parent=1 // pred_check
      _
    $region7: #{_lambda_.1} parent=1 // pred_check_branch
      %19 = sbr.rel (0) target = $region9
    $region8: #{_lambda_.1} parent=1 // pred_region
      %21 = vsyncadd [#allocation3], 0
      %s22 = sshll.u32 %s1, 4
      %s23 = int_to_ptr.hbm [resolvable:$true] %s22
      %s24 = sshll.u32 [#allocation2], 4
      %s25 = int_to_ptr.vmem [resolvable:$true] %s24
      %30 = dma.hbm_to_vmem [thread:$0]  %s23, 1536, %s25, [#allocation3], 128, 128, 8
    $region9: #{_lambda_.1} parent=1 // pred_fallthru
      _
    // Predicated region
    $region10: #{_lambda_.1} parent=1 // pred_check
      _
    $region11: #{_lambda_.1} parent=1 // pred_check_branch
      %32 = sbr.rel (0) target = $region13
    $region12: #{_lambda_.1} parent=1 // pred_region
      _
    $region13: #{_lambda_.1} parent=1 // pred_fallthru
      _
    // Predicated region
    $region14: #{_lambda_.1} parent=1 // pred_check
      _
    $region15: #{_lambda_.1} parent=1 // pred_check_branch
      %34 = sbr.rel (0) target = $region17
    $region16: #{_lambda_.1} parent=1 // pred_region
      %36 = vsyncadd [#allocation6], 0
      %s37 = sshll.u32 %s3, 4
      %s38 = int_to_ptr.hbm [resolvable:$true] %s37
      %s39 = sshll.u32 [#allocation5], 4
      %s40 = int_to_ptr.vmem [resolvable:$true] %s39
      %45 = dma.hbm_to_vmem [thread:$0]  %s38, 1024, %s40, [#allocation6], 128, 128, 8
    $region17: #{_lambda_.1} parent=1 // pred_fallthru
      _
    // Predicated region
    $region18: #{_lambda_.1} parent=1 // pred_check
      _
    $region19: #{_lambda_.1} parent=1 // pred_check_branch
      %47 = sbr.rel (0) target = $region21
    $region20: #{_lambda_.1} parent=1 // pred_region
      _
    $region21: #{_lambda_.1} parent=1 // pred_fallthru
      _
    // Predicated region
    $region22: #{_lambda_.1} parent=1 // pred_check
      _
    $region23: #{_lambda_.1} parent=1 // pred_check_branch
      %49 = sbr.rel (0) target = $region25
    $region24: #{_lambda_.1} parent=1 // pred_region
      %51 = dma.done [#allocation3], 1536
    $region25: #{_lambda_.1} parent=1 // pred_fallthru
      _
    // Predicated region
    $region26: #{_lambda_.1} parent=1 // pred_check
      _
    $region27: #{_lambda_.1} parent=1 // pred_check_branch
      %53 = sbr.rel (0) target = $region29
    $region28: #{_lambda_.1} parent=1 // pred_region
      %55 = dma.done [#allocation6], 1024
    $region29: #{_lambda_.1} parent=1 // pred_fallthru
      _
    %v56 = vld [vmem:[%s0] sm:$0xff]
    %v57 = vld [vmem:[#allocation2] sm:$0xff]
    %v58 = vld [vmem:[#allocation2 + $0x8] sm:$0xff]
    %v59 = vld [vmem:[#allocation2 + $0x10] sm:$0xff]
    %v60 = vld [vmem:[#allocation2 + $0x18] sm:$0xff]
    %v61 = vld [vmem:[#allocation2 + $0x20] sm:$0xff]
    %v62 = vld [vmem:[#allocation2 + $0x28] sm:$0xff]
    %v63 = vld [vmem:[#allocation2 + $0x30] sm:$0xff]
    %v64 = vld [vmem:[#allocation2 + $0x38] sm:$0xff]
    %v65 = vld [vmem:[#allocation2 + $0x40] sm:$0xff]
    %v66 = vld [vmem:[#allocation2 + $0x48] sm:$0xff]
    %v67 = vld [vmem:[#allocation2 + $0x50] sm:$0xff]
    %v68 = vld [vmem:[#allocation2 + $0x58] sm:$0xff]
    %v69 = vld [vmem:[%s2] sm:$0x1]
    %v71 = vperm.slane %v69, 0
    %vm73 = vcmask 785408
    %v75 = vsel %vm73, %v56, 0
    %77 = vmatpush.msra.mxu0 0.0
    %78 = vmatpush.msra.mxu0 0.0
    %79 = vmatpush.msra.mxu0 0.0
    %80 = vmatpush.msra.mxu0 0.0
    %81 = vmatpush.msra.mxu0 %v68
    %82 = vmatpush.msra.mxu0 %v67
    %83 = vmatpush.msra.mxu0 %v66
    %84 = vmatpush.msra.mxu0 %v65
    %85 = vmatpush.msra.mxu0 %v64
    %86 = vmatpush.msra.mxu0 %v63
    %87 = vmatpush.msra.mxu0 %v62
    %88 = vmatpush.msra.mxu0 %v61
    %89 = vmatpush.msra.mxu0 %v60
    %90 = vmatpush.msra.mxu0 %v59
    %91 = vmatpush.msra.mxu0 %v58
    %92 = vmatpush.msra.mxu0 %v57
    %93 = vmatmul.f32.gmra.mxu0 %v75
    %v94 = vpop.f32.mrf.mxu0
    %v95 = vadd.f32 %v71, %v94
    %96 = vdwg.mxu0
    %v97 = vtanh.pop %v95
    %vm98 = vcmask 523264
    %99 = vst.msk [vmem:[#allocation8] sm:$0xff] %vm98, %v97
    %v100 = vld [vmem:[#allocation5] sm:$0xff]
    %v101 = vld [vmem:[#allocation5 + $0x8] sm:$0xff]
    %v102 = vld [vmem:[#allocation5 + $0x10] sm:$0xff]
    %v103 = vld [vmem:[#allocation5 + $0x18] sm:$0xff]
    %v104 = vld [vmem:[#allocation5 + $0x20] sm:$0xff]
    %v105 = vld [vmem:[#allocation5 + $0x28] sm:$0xff]
    %v106 = vld [vmem:[#allocation5 + $0x30] sm:$0xff]
    %v107 = vld [vmem:[#allocation5 + $0x38] sm:$0xff]
    %v108 = vld [vmem:[%s4] sm:$0x1]
    %v110 = vperm.slane %v108, 0
    %v113 = vsel %vm98, %v97, 0
    %115 = vmatpush.msra.mxu0 0.0
    %116 = vmatpush.msra.mxu0 0.0
    %117 = vmatpush.msra.mxu0 0.0
    %118 = vmatpush.msra.mxu0 0.0
    %119 = vmatpush.msra.mxu0 0.0
    %120 = vmatpush.msra.mxu0 0.0
    %121 = vmatpush.msra.mxu0 0.0
    %122 = vmatpush.msra.mxu0 0.0
    %123 = vmatpush.msra.mxu0 %v107
    %124 = vmatpush.msra.mxu0 %v106
    %125 = vmatpush.msra.mxu0 %v105
    %126 = vmatpush.msra.mxu0 %v104
    %127 = vmatpush.msra.mxu0 %v103
    %128 = vmatpush.msra.mxu0 %v102
    %129 = vmatpush.msra.mxu0 %v101
    %130 = vmatpush.msra.mxu0 %v100
    %131 = vmatmul.f32.gmra.mxu0 %v113
    %v132 = vpop.f32.mrf.mxu0
    %v133 = vadd.f32 %v110, %v132
    %134 = vdwg.mxu0
    %vm135 = vcmask 261120
    %136 = vst.msk [vmem:[#allocation7] sm:$0xff] %vm135, %v133
    // Predicated region
    $region30: #{_lambda_.1} parent=1 // pred_check
      _
    $region31: #{_lambda_.1} parent=1 // pred_check_branch
      %138 = sbr.rel (0) target = $region33
    $region32: #{_lambda_.1} parent=1 // pred_region
      %140 = vsyncadd [#allocation4], 0
      %s142 = sshll.u32 [#allocation7], 4
      %s143 = int_to_ptr.vmem [resolvable:$true] %s142
      %s144 = sshll.u32 %s5, 4
      %s145 = int_to_ptr.hbm [resolvable:$true] %s144
      %147 = dma.vmem_to_hbm [thread:$0]  %s143, 128, %s145, [#allocation4]
    $region33: #{_lambda_.1} parent=1 // pred_fallthru
      _
    // Predicated region
    $region34: #{_lambda_.1} parent=1 // pred_check
      _
    $region35: #{_lambda_.1} parent=1 // pred_check_branch
      %149 = sbr.rel (0) target = $region37
    $region36: #{_lambda_.1} parent=1 // pred_region
      %151 = vsyncadd [#allocation9], 0
      %s153 = sshll.u32 [#allocation8], 4
      %s154 = int_to_ptr.vmem [resolvable:$true] %s153
      %s155 = sshll.u32 %s6, 4
      %s156 = int_to_ptr.hbm [resolvable:$true] %s155
      %158 = dma.vmem_to_hbm [thread:$0]  %s154, 128, %s156, [#allocation9]
    $region37: #{_lambda_.1} parent=1 // pred_fallthru
      _
    // Predicated region
    $region38: #{_lambda_.1} parent=1 // pred_check
      _
    $region39: #{_lambda_.1} parent=1 // pred_check_branch
      %160 = sbr.rel (0) target = $region41
    $region40: #{_lambda_.1} parent=1 // pred_region
      %162 = dma.done [#allocation4], 128
    $region41: #{_lambda_.1} parent=1 // pred_fallthru
      _
    // Predicated region
    $region42: #{_lambda_.1} parent=1 // pred_check
      _
    $region43: #{_lambda_.1} parent=1 // pred_check_branch
      %164 = sbr.rel (0) target = $region45
    $region44: #{_lambda_.1} parent=1 // pred_region
      %166 = dma.done [#allocation9], 128
    $region45: #{_lambda_.1} parent=1 // pred_fallthru
      _
    %167 = vsyncpa [#allocation3], 1
    %168 = vsyncpa [#allocation6], 1
    %169 = vsyncpa [#allocation4], 1
    %170 = vsyncpa [#allocation9], 1

</llo_original>
